<compile_context>
chip_gen: v7x
topology: tpu7x:2x2x1
jax: 0.10.0
libtpu: 0.0.40
codegen_flags: <defaults>
</compile_context>

<pallas_src>
import math

import jax
import jax.numpy as jnp
from jax.experimental import pallas as pl
from jax.experimental.pallas import tpu as pltpu


_VMEM_BUDGET_BYTES = 40 * 1024 * 1024  # conservative: v7x has 64 MiB physical / TC
_LN_EPS = 1e-5


# ------------------------------ fused kernel --------------------------------

def _adaln_zero_kernel(x_ref, cond_ref, w_ref, b_ref, o_ref):
    # x_ref:    (TR, D_out)       activation tile
    # cond_ref: (TR, D_in)        conditioning tile
    # w_ref:    (D_in, 2*D_out)   fused [scale | shift] weight, bf16, resident
    # b_ref:    (1, 2*D_out)      fused bias, f32, resident
    d_out = o_ref.shape[-1]

    # LayerNorm without affine (eps = 1e-5, matches nn.LayerNorm default).
    # f32 math on the VPU; reuse the centered value.
    x = x_ref[...].astype(jnp.float32)
    mean = jnp.mean(x, axis=-1, keepdims=True)
    centered = x - mean
    var = jnp.mean(centered * centered, axis=-1, keepdims=True)
    x_norm = centered * jax.lax.rsqrt(var + _LN_EPS)

    # One fused bf16 MXU matmul for both projections, f32 accumulation.
    cond = cond_ref[...].astype(jnp.bfloat16)
    proj = jnp.dot(cond, w_ref[...], preferred_element_type=jnp.float32)
    proj = proj + b_ref[...].astype(jnp.float32)
    scale = proj[:, :d_out]          # lane-aligned split (D_out % 128 == 0)
    shift = proj[:, d_out:]

    o_ref[...] = (scale * x_norm + shift).astype(o_ref.dtype)


# ------------------------------ tiling helpers -------------------------------

def _round_up(n, m):
    return ((n + m - 1) // m) * m


def _pick_row_tile(rows, d_in, d_out, x_bytes, cond_bytes, weight_bytes):
    """Largest row tile whose buffers fit the VMEM budget."""
    # Double-buffered pipelined HBM tiles (x, cond, out) ...
    per_row = 2 * (d_out * x_bytes + d_in * cond_bytes + d_out * x_bytes)
    # ... plus a rough allowance for in-kernel f32 temporaries (x_f32/centered,
    # x_norm, proj) which are not pipelined.
    per_row += 4 * d_out * 4 + d_in * 4
    avail = _VMEM_BUDGET_BYTES - weight_bytes - (2 << 20)  # compiler slack
    tr = 8
    for cand in (1024, 512, 256, 128, 64, 32, 16, 8):
        if cand * per_row <= avail:
            tr = cand
            break
    # Never tile wider than the (sublane-padded) row count itself.
    return min(tr, _round_up(rows, 8))


# ------------------------------ entry point ----------------------------------

def adaln_zero(x, cond, params):
    """x: (..., D_out); cond: (..., D_in) with identical leading dims."""
    lead = x.shape[:-1]
    d_out = x.shape[-1]
    d_in = cond.shape[-1]
    assert cond.shape[:-1] == lead, (x.shape, cond.shape)

    w = params["w_fused"]                                      # (d_in, 2*d_out) bf16
    b = params["b_fused"].reshape(1, 2 * d_out).astype(jnp.float32)
    assert w.shape == (d_in, 2 * d_out), w.shape

    rows = math.prod(lead)
    x2 = x.reshape(rows, d_out)
    c2 = cond.reshape(rows, d_in)

    weight_bytes = w.size * w.dtype.itemsize + b.size * b.dtype.itemsize
    tr = _pick_row_tile(rows, d_in, d_out,
                        x2.dtype.itemsize, c2.dtype.itemsize, weight_bytes)

    # Ragged row counts: pad up to a tile multiple (padding rows are sliced
    # off at the end; LN on zero rows stays finite thanks to eps).
    rows_p = _round_up(rows, tr)
    if rows_p != rows:
        x2 = jnp.pad(x2, ((0, rows_p - rows), (0, 0)))
        c2 = jnp.pad(c2, ((0, rows_p - rows), (0, 0)))

    grid = (rows_p // tr,)
    resident = pl.Buffered(1)  # constant-index operands: single-buffer them

    out = pl.pallas_call(
        _adaln_zero_kernel,
        grid=grid,
        in_specs=[
            pl.BlockSpec((tr, d_out), lambda i: (i, 0)),               # x tile
            pl.BlockSpec((tr, d_in), lambda i: (i, 0)),                # cond tile
            pl.BlockSpec((d_in, 2 * d_out), lambda i: (0, 0),
                         pipeline_mode=resident),                      # fused W
            pl.BlockSpec((1, 2 * d_out), lambda i: (0, 0),
                         pipeline_mode=resident),                      # fused b
        ],
        out_specs=pl.BlockSpec((tr, d_out), lambda i: (i, 0)),
        out_shape=jax.ShapeDtypeStruct((rows_p, d_out), x.dtype),
        compiler_params=pltpu.CompilerParams(
            dimension_semantics=("parallel",),
            vmem_limit_bytes=_VMEM_BUDGET_BYTES,
        ),
    )(x2, c2, w, b)

    return out[:rows].reshape(*lead, d_out)


# ------------------------------ parameters ----------------------------------

def init_adaln_zero_params(key, in_dim, out_dim):
    # Matches PyTorch AdaLNZero: both Linear weights zero-initialized, biases
    # keep nn.Linear's default uniform(-1/sqrt(in_dim), 1/sqrt(in_dim)).
    # scale and shift are fused along the output axis: [scale | shift], and
    # the weight is stored pre-transposed as (in_dim, 2*out_dim) in bf16.
    k_bs, k_bsh = jax.random.split(key)
    bound = 1.0 / math.sqrt(in_dim)
    b_scale = jax.random.uniform(k_bs, (out_dim,), jnp.float32, -bound, bound)
    b_shift = jax.random.uniform(k_bsh, (out_dim,), jnp.float32, -bound, bound)
    return {
        "w_fused": jnp.zeros((in_dim, 2 * out_dim), jnp.bfloat16),
        "b_fused": jnp.concatenate([b_scale, b_shift]),
    }


# --------------------------- pure-JAX reference ------------------------------

def adaln_zero_ref(x, cond, params):
    d_out = x.shape[-1]
    mean = jnp.mean(x, axis=-1, keepdims=True)
    var = jnp.mean((x - mean) ** 2, axis=-1, keepdims=True)
    x_norm = (x - mean) * jax.lax.rsqrt(var + _LN_EPS)
    w = params["w_fused"].astype(jnp.float32)
    proj = cond @ w + params["b_fused"]
    scale, shift = proj[..., :d_out], proj[..., d_out:]
    return scale * x_norm + shift


# --------------------------------- main --------------------------------------

if __name__ == "__main__":
    # Small but lane-dense shapes (feature dims multiples of 128).
    N, S = 2, 8
    D_IN, D_OUT = 128, 128

    key = jax.random.PRNGKey(0)
    kx, kc, kp, kw = jax.random.split(key, 4)
    x = jax.random.normal(kx, (N, S, D_OUT), jnp.float32)
    cond = jax.random.normal(kc, (N, S, D_IN), jnp.float32)

    # 1) Module-faithful parameters (zero-init projection weights).
    params = init_adaln_zero_params(kp, in_dim=D_IN, out_dim=D_OUT)
    out = jax.block_until_ready(adaln_zero(x, cond, params))
    ref = adaln_zero_ref(x, cond, params)
    assert out.shape == (N, S, D_OUT), out.shape
    assert jnp.allclose(out, ref, atol=1e-5, rtol=1e-5), float(
        jnp.max(jnp.abs(out - ref)))

    # 2) Random weights to exercise the fused bf16 MXU matmul path
    #    (looser tolerance: operands are deliberately bf16-quantized).
    params_rand = dict(params)
    params_rand["w_fused"] = (
        0.02 * jax.random.normal(kw, (D_IN, 2 * D_OUT), jnp.float32)
    ).astype(jnp.bfloat16)
    out_r = jax.block_until_ready(adaln_zero(x, cond, params_rand))
    ref_r = adaln_zero_ref(x, cond, params_rand)
    assert jnp.allclose(out_r, ref_r, atol=5e-2, rtol=5e-2), float(
        jnp.max(jnp.abs(out_r - ref_r)))

    print("KERNEL_OK")
</pallas_src>

<mosaic_0001>
module attributes {stable_mosaic.version = 11 : i64} {
  func.func @_adaln_zero_kernel(%arg0: i32, %arg1: memref<16x128xf32, #tpu.memory_space<vmem>>, %arg2: memref<16x128xf32, #tpu.memory_space<vmem>>, %arg3: memref<128x256xbf16, #tpu.memory_space<vmem>>, %arg4: memref<1x256xf32, #tpu.memory_space<vmem>>, %arg5: memref<16x128xf32, #tpu.memory_space<vmem>>) attributes {dimension_semantics = [#tpu.dimension_semantics<parallel>], iteration_bounds = array<i64: 1>, scalar_prefetch = 0 : i64, scratch_operands = 0 : i64, tpu.core_type = #tpu.core_type<tc>, window_params = [{transform_indices = @transform_0, window_bounds = array<i64: 16, 128>}, {transform_indices = @transform_1, window_bounds = array<i64: 16, 128>}, {pipeline_mode = #tpu.pipeline_mode<synchronous>, transform_indices = @transform_2, window_bounds = array<i64: 128, 256>}, {pipeline_mode = #tpu.pipeline_mode<synchronous>, transform_indices = @transform_3, window_bounds = array<i64: 1, 256>}, {transform_indices = @transform_4, window_bounds = array<i64: 16, 128>}]} {
    %c0 = arith.constant 0 : index
    %c0_0 = arith.constant 0 : index
    %0 = vector.load %arg1[%c0, %c0_0] : memref<16x128xf32, #tpu.memory_space<vmem>>, vector<16x128xf32>
    %cst = arith.constant dense<0.000000e+00> : vector<16xf32>
    %1 = vector.multi_reduction <add>, %0, %cst [1] : vector<16x128xf32> to vector<16xf32>
    %2 = vector.shape_cast %1 : vector<16xf32> to vector<16x1xf32>
    %cst_1 = arith.constant 1.280000e+02 : f32
    %3 = vector.broadcast %cst_1 : f32 to vector<16x1xf32>
    %4 = arith.divf %2, %3 : vector<16x1xf32>
    %5 = vector.broadcast %4 : vector<16x1xf32> to vector<16x128xf32>
    %6 = arith.subf %0, %5 : vector<16x128xf32>
    %7 = arith.mulf %6, %6 : vector<16x128xf32>
    %cst_2 = arith.constant dense<0.000000e+00> : vector<16xf32>
    %8 = vector.multi_reduction <add>, %7, %cst_2 [1] : vector<16x128xf32> to vector<16xf32>
    %9 = vector.shape_cast %8 : vector<16xf32> to vector<16x1xf32>
    %cst_3 = arith.constant 1.280000e+02 : f32
    %10 = vector.broadcast %cst_3 : f32 to vector<16x1xf32>
    %11 = arith.divf %9, %10 : vector<16x1xf32>
    %cst_4 = arith.constant 9.99999974E-6 : f32
    %12 = vector.broadcast %cst_4 : f32 to vector<16x1xf32>
    %13 = arith.addf %11, %12 : vector<16x1xf32>
    %14 = math.rsqrt %13 : vector<16x1xf32>
    %15 = vector.broadcast %14 : vector<16x1xf32> to vector<16x128xf32>
    %16 = arith.mulf %6, %15 : vector<16x128xf32>
    %c0_5 = arith.constant 0 : index
    %c0_6 = arith.constant 0 : index
    %17 = vector.load %arg2[%c0_5, %c0_6] : memref<16x128xf32, #tpu.memory_space<vmem>>, vector<16x128xf32>
    %18 = arith.truncf %17 : vector<16x128xf32> to vector<16x128xbf16>
    %c0_7 = arith.constant 0 : index
    %c0_8 = arith.constant 0 : index
    %19 = vector.load %arg3[%c0_7, %c0_8] : memref<128x256xbf16, #tpu.memory_space<vmem>>, vector<128x256xbf16>
    %cst_9 = arith.constant dense<0.000000e+00> : vector<16x256xf32>
    %20 = tpu.matmul %18, %19, %cst_9 {dimension_numbers = #tpu.dot_dimension_numbers<[1], [0], [0], [1], [0, 0, 1, 1], [], []>} : vector<16x128xbf16>, vector<128x256xbf16>, vector<16x256xf32> -> vector<16x256xf32>
    %c0_10 = arith.constant 0 : index
    %c0_11 = arith.constant 0 : index
    %21 = vector.load %arg4[%c0_10, %c0_11] : memref<1x256xf32, #tpu.memory_space<vmem>>, vector<1x256xf32>
    %22 = vector.broadcast %21 : vector<1x256xf32> to vector<16x256xf32>
    %23 = arith.addf %20, %22 : vector<16x256xf32>
    %24 = vector.extract_strided_slice %23 {offsets = [0, 0], sizes = [16, 128], strides = [1, 1]} : vector<16x256xf32> to vector<16x128xf32>
    %25 = vector.extract_strided_slice %23 {offsets = [0, 128], sizes = [16, 128], strides = [1, 1]} : vector<16x256xf32> to vector<16x128xf32>
    %26 = arith.mulf %24, %16 : vector<16x128xf32>
    %27 = arith.addf %26, %25 : vector<16x128xf32>
    %c0_12 = arith.constant 0 : index
    %c0_13 = arith.constant 0 : index
    %28 = vector.load %arg5[%c0_12, %c0_13] : memref<16x128xf32, #tpu.memory_space<vmem>>, vector<16x128xf32>
    tpu.vector_store %arg5[%c0_12, %c0_13], %27 {strides = array<i32>} : memref<16x128xf32, #tpu.memory_space<vmem>>, vector<16x128xf32>,
    return
  }
  func.func @transform_0(%arg0: i32) -> (i32, i32) {
    %c0_i32 = arith.constant 0 : i32
    %c0_i32_0 = arith.constant 0 : i32
    return %arg0, %c0_i32 : i32, i32
  }
  func.func @transform_1(%arg0: i32) -> (i32, i32) {
    %c0_i32 = arith.constant 0 : i32
    %c0_i32_0 = arith.constant 0 : i32
    return %arg0, %c0_i32 : i32, i32
  }
  func.func @transform_2(%arg0: i32) -> (i32, i32) {
    %c0_i32 = arith.constant 0 : i32
    %c0_i32_0 = arith.constant 0 : i32
    %c0_i32_1 = arith.constant 0 : i32
    return %c0_i32, %c0_i32_0 : i32, i32
  }
  func.func @transform_3(%arg0: i32) -> (i32, i32) {
    %c0_i32 = arith.constant 0 : i32
    %c0_i32_0 = arith.constant 0 : i32
    %c0_i32_1 = arith.constant 0 : i32
    return %c0_i32, %c0_i32_0 : i32, i32
  }
  func.func @transform_4(%arg0: i32) -> (i32, i32) {
    %c0_i32 = arith.constant 0 : i32
    %c0_i32_0 = arith.constant 0 : i32
    return %arg0, %c0_i32 : i32, i32
  }
}

</mosaic_0001>

<llo_original>
// kernel: tpu_custom_call.1
$region0: #{tpu_custom_call.1}
  #allocation0 [shape = 'u32[]', space=smem, size = 0x4, offset = 0x4, fixed_abs, tag = 'smem constant byte address 0x4 - core index']
  #allocation1 [shape = 'u32[144,128]{1,0:T(1,128)}', space=vmem, size = 0x12000, scoped, tag = 'internal scratch']
  %s0 = inlined_call_operand.hbm [shape: f32[16,128], index: 0, kind: input, shape index: {}]
  %s1 = inlined_call_operand.hbm [shape: f32[16,128], index: 1, kind: input, shape index: {}]
  %s2 = inlined_call_operand.hbm [shape: bf16[128,256], index: 2, kind: input, shape index: {}]
  %s3 = inlined_call_operand.vmem [shape: f32[1,256], index: 3, kind: input, shape index: {}]
  %s4 = inlined_call_operand.hbm [shape: f32[16,128], index: 4, kind: output, shape index: {}]
  %s5 = sld [smem:[#allocation0]]
  $region38: #{tpu_custom_call.1} parent=0
    _
  %s7 = ssub.s32 1, %s5
  %s8 = scalar_select 0, %s7, %s5
  $region1: #{tpu_custom_call.1} parent=0
    #allocation2 [shape = 'u8[8192]{0}', space=vmem, size = 0x2000, scoped, tag = 'input window, operand 0, single buffered']
    #allocation3 [shape = 's32[1]{0}', space=sflag, size = 0x4, scoped, tag = 'scoped memory for tpu_custom_call.1']
    #allocation4 [shape = 's32[1]{0}', space=sflag, size = 0x4, scoped, tag = 'scoped memory for tpu_custom_call.1']
    #allocation5 [shape = 'u8[8192]{0}', space=vmem, size = 0x2000, scoped, tag = 'input window, operand 1, single buffered']
    #allocation6 [shape = 's32[1]{0}', space=sflag, size = 0x4, scoped, tag = 'scoped memory for tpu_custom_call.1']
    #allocation7 [shape = 'u8[65536]{0}', space=vmem, size = 0x10000, scoped, tag = 'input window, operand 2, single buffered']
    #allocation8 [shape = 'u8[8192]{0}', space=vmem, size = 0x2000, scoped, tag = 'output window, operand 0, single buffered']
    %9 = vsyncpa [#allocation3], 0
    %10 = vsyncpa [#allocation6], 0
    %11 = vsyncpa [#allocation4], 0
    // Predicated region
    $region2: #{tpu_custom_call.1} parent=1 // pred_check
      _
    $region3: #{tpu_custom_call.1} parent=1 // pred_check_branch
      %13 = sbr.rel (0) target = $region5
    $region4: #{tpu_custom_call.1} parent=1 // pred_region
      %s15 = ssub.s32 256, 256
      %16 = vsyncadd [#allocation3], %s15
      %s17 = sshll.u32 [#allocation2], 4
      %s18 = int_to_ptr.vmem [resolvable:$true] %s17
      %23 = dma.hbm_to_vmem [thread:$0]  %s0, 256, %s18, [#allocation3], 128, 128, 8
    $region5: #{tpu_custom_call.1} parent=1 // pred_fallthru
      _
    // Predicated region
    $region6: #{tpu_custom_call.1} parent=1 // pred_check
      _
    $region7: #{tpu_custom_call.1} parent=1 // pred_check_branch
      %25 = sbr.rel (0) target = $region9
    $region8: #{tpu_custom_call.1} parent=1 // pred_region
      %s27 = ssub.s32 256, 256
      %28 = vsyncadd [#allocation6], %s27
      %s29 = sshll.u32 [#allocation5], 4
      %s30 = int_to_ptr.vmem [resolvable:$true] %s29
      %35 = dma.hbm_to_vmem [thread:$0]  %s1, 256, %s30, [#allocation6], 128, 128, 8
    $region9: #{tpu_custom_call.1} parent=1 // pred_fallthru
      _
    // Predicated region
    $region10: #{tpu_custom_call.1} parent=1 // pred_check
      _
    $region11: #{tpu_custom_call.1} parent=1 // pred_check_branch
      %37 = sbr.rel (0) target = $region13
    $region12: #{tpu_custom_call.1} parent=1 // pred_region
      %s39 = ssub.s32 2048, 2048
      %40 = vsyncadd [#allocation6], %s39
      %s41 = sshll.u32 [#allocation7], 4
      %s42 = int_to_ptr.vmem [resolvable:$true] %s41
      %47 = dma.hbm_to_vmem [thread:$0]  %s2, 2048, %s42, [#allocation6], 128, 128, 8
    $region13: #{tpu_custom_call.1} parent=1 // pred_fallthru
      _
    // Predicated region
    $region14: #{tpu_custom_call.1} parent=1 // pred_check
      _
    $region15: #{tpu_custom_call.1} parent=1 // pred_check_branch
      %49 = sbr.rel (0) target = $region17
    $region16: #{tpu_custom_call.1} parent=1 // pred_region
      _
    $region17: #{tpu_custom_call.1} parent=1 // pred_fallthru
      _
    // Predicated region
    $region18: #{tpu_custom_call.1} parent=1 // pred_check
      _
    $region19: #{tpu_custom_call.1} parent=1 // pred_check_branch
      %51 = sbr.rel (0) target = $region21
    $region20: #{tpu_custom_call.1} parent=1 // pred_region
      %52 = dma.done [#allocation3], 256
    $region21: #{tpu_custom_call.1} parent=1 // pred_fallthru
      _
    // Predicated region
    $region22: #{tpu_custom_call.1} parent=1 // pred_check
      _
    $region23: #{tpu_custom_call.1} parent=1 // pred_check_branch
      %54 = sbr.rel (0) target = $region25
    $region24: #{tpu_custom_call.1} parent=1 // pred_region
      %55 = dma.done [#allocation6], 256
    $region25: #{tpu_custom_call.1} parent=1 // pred_fallthru
      _
    // Predicated region
    $region26: #{tpu_custom_call.1} parent=1 // pred_check
      _
    $region27: #{tpu_custom_call.1} parent=1 // pred_check_branch
      %57 = sbr.rel (0) target = $region29
    $region28: #{tpu_custom_call.1} parent=1 // pred_region
      %58 = dma.done [#allocation6], 2048
    $region29: #{tpu_custom_call.1} parent=1 // pred_fallthru
      _
    %v60 = vld [vmem:[#allocation2] sm:$0xff]
    %v61 = vld [vmem:[#allocation2 + $0x8] sm:$0xff]
    %62 = vadd.xlane.f32.xlu0 %v60
    %v63 = vpop.xlane.xlu0 %62
    %64 = vadd.xlane.f32.xlu0 %v61
    %v65 = vpop.xlane.xlu0 %64
    %v66 = vrcp.pop 128.0
    %v67 = vmul.f32 %v63, %v66
    %v68 = vmul.f32 %v65, %v66
    %v69 = vsub.f32 %v60, %v67
    %v70 = vsub.f32 %v61, %v68
    %v71 = vmul.f32 %v69, %v69
    %v72 = vmul.f32 %v70, %v70
    %73 = vadd.xlane.f32.xlu0 %v71
    %v74 = vpop.xlane.xlu0 %73
    %75 = vadd.xlane.f32.xlu0 %v72
    %v76 = vpop.xlane.xlu0 %75
    %v77 = vmul.f32 %v74, %v66
    %v78 = vmul.f32 %v76, %v66
    %v79 = vadd.f32 %v77, 1e-05
    %v80 = vadd.f32 %v78, 1e-05
    %v81 = vrsqrt.pop %v79
    %v82 = vrsqrt.pop %v80
    %v83 = vmul.f32 %v69, %v81
    %v84 = vmul.f32 %v70, %v82
    %v85 = vld [vmem:[#allocation5] sm:$0xff]
    %v86 = vld [vmem:[#allocation5 + $0x8] sm:$0xff]
    %v87 = vpack.c.bf16 %v86, %v85
    %v88 = vld [vmem:[#allocation7] sm:$0xff]
    %v89 = vld [vmem:[#allocation7 + $0x8] sm:$0xff]
    %v90 = vld [vmem:[#allocation7 + $0x10] sm:$0xff]
    %v91 = vld [vmem:[#allocation7 + $0x18] sm:$0xff]
    %v92 = vld [vmem:[#allocation7 + $0x20] sm:$0xff]
    %v93 = vld [vmem:[#allocation7 + $0x28] sm:$0xff]
    %v94 = vld [vmem:[#allocation7 + $0x30] sm:$0xff]
    %v95 = vld [vmem:[#allocation7 + $0x38] sm:$0xff]
    %v96 = vld [vmem:[#allocation7 + $0x40] sm:$0xff]
    %v97 = vld [vmem:[#allocation7 + $0x48] sm:$0xff]
    %v98 = vld [vmem:[#allocation7 + $0x50] sm:$0xff]
    %v99 = vld [vmem:[#allocation7 + $0x58] sm:$0xff]
    %v100 = vld [vmem:[#allocation7 + $0x60] sm:$0xff]
    %v101 = vld [vmem:[#allocation7 + $0x68] sm:$0xff]
    %v102 = vld [vmem:[#allocation7 + $0x70] sm:$0xff]
    %v103 = vld [vmem:[#allocation7 + $0x78] sm:$0xff]
    %v104 = vld [vmem:[%s3] sm:$0x3]
    %v106 = vlaneseq
    %v107 = vshrl.u32 %v106, 7
    %v108 = vsub.s32 0, %v107
    %v109 = vrot.slane %v104, %v108
    %v110 = vlaneseq
    %v111 = vshrl.u32 %v110, 7
    %v112 = vsub.s32 1, %v111
    %v113 = vrot.slane %v104, %v112
    %v132 = vunpack.c.l.b16 %v88
    %v133 = vunpack.c.h.b16 %v88
    %v134 = vunpack.c.l.b16 %v89
    %v135 = vunpack.c.h.b16 %v89
    %v136 = vunpack.c.l.b16 %v90
    %v137 = vunpack.c.h.b16 %v90
    %v138 = vunpack.c.l.b16 %v91
    %v139 = vunpack.c.h.b16 %v91
    %v140 = vunpack.c.l.b16 %v92
    %v141 = vunpack.c.h.b16 %v92
    %v142 = vunpack.c.l.b16 %v93
    %v143 = vunpack.c.h.b16 %v93
    %v144 = vunpack.c.l.b16 %v94
    %v145 = vunpack.c.h.b16 %v94
    %v146 = vunpack.c.l.b16 %v95
    %v147 = vunpack.c.h.b16 %v95
    %v148 = vunpack.c.l.b16 %v96
    %v149 = vunpack.c.h.b16 %v96
    %v150 = vunpack.c.l.b16 %v97
    %v151 = vunpack.c.h.b16 %v97
    %v152 = vunpack.c.l.b16 %v98
    %v153 = vunpack.c.h.b16 %v98
    %v154 = vunpack.c.l.b16 %v99
    %v155 = vunpack.c.h.b16 %v99
    %v156 = vunpack.c.l.b16 %v100
    %v157 = vunpack.c.h.b16 %v100
    %v158 = vunpack.c.l.b16 %v101
    %v159 = vunpack.c.h.b16 %v101
    %v160 = vunpack.c.l.b16 %v102
    %v161 = vunpack.c.h.b16 %v102
    %v162 = vunpack.c.l.b16 %v103
    %v163 = vunpack.c.h.b16 %v103
    %v164 = vpack.c.b16 %v134, %v132
    %v165 = vpack.c.b16 %v135, %v133
    %v166 = vpack.c.b16 %v138, %v136
    %v167 = vpack.c.b16 %v139, %v137
    %v168 = vpack.c.b16 %v142, %v140
    %v169 = vpack.c.b16 %v143, %v141
    %v170 = vpack.c.b16 %v146, %v144
    %v171 = vpack.c.b16 %v147, %v145
    %v172 = vpack.c.b16 %v150, %v148
    %v173 = vpack.c.b16 %v151, %v149
    %v174 = vpack.c.b16 %v154, %v152
    %v175 = vpack.c.b16 %v155, %v153
    %v176 = vpack.c.b16 %v158, %v156
    %v177 = vpack.c.b16 %v159, %v157
    %v178 = vpack.c.b16 %v162, %v160
    %v179 = vpack.c.b16 %v163, %v161
    %196 = vmatprep.subr.bf16.mxu0 %v165
    %197 = vmatpush1.bf16.msra.mxu0 %v164
    %198 = vmatprep.subr.bf16.mxu0 %v167
    %199 = vmatpush1.bf16.msra.mxu0 %v166
    %200 = vmatprep.subr.bf16.mxu0 %v169
    %201 = vmatpush1.bf16.msra.mxu0 %v168
    %202 = vmatprep.subr.bf16.mxu0 %v171
    %203 = vmatpush1.bf16.msra.mxu0 %v170
    %204 = vmatprep.subr.bf16.mxu0 %v173
    %205 = vmatpush1.bf16.msra.mxu0 %v172
    %206 = vmatprep.subr.bf16.mxu0 %v175
    %207 = vmatpush1.bf16.msra.mxu0 %v174
    %208 = vmatprep.subr.bf16.mxu0 %v177
    %209 = vmatpush1.bf16.msra.mxu0 %v176
    %210 = vmatprep.subr.bf16.mxu0 %v179
    %211 = vmatpush1.bf16.msra.mxu0 %v178
    %212 = vmatprep.subr.bf16.mxu0 0
    %213 = vmatpush1.bf16.msra.mxu0 0
    %214 = vmatprep.subr.bf16.mxu0 0
    %215 = vmatpush1.bf16.msra.mxu0 0
    %216 = vmatprep.subr.bf16.mxu0 0
    %217 = vmatpush1.bf16.msra.mxu0 0
    %218 = vmatprep.subr.bf16.mxu0 0
    %219 = vmatpush1.bf16.msra.mxu0 0
    %220 = vmatprep.subr.bf16.mxu0 0
    %221 = vmatpush1.bf16.msra.mxu0 0
    %222 = vmatprep.subr.bf16.mxu0 0
    %223 = vmatpush1.bf16.msra.mxu0 0
    %224 = vmatprep.subr.bf16.mxu0 0
    %225 = vmatpush1.bf16.msra.mxu0 0
    %226 = vmatprep.subr.bf16.mxu0 0
    %227 = vmatpush1.bf16.msra.mxu0 0
    %228 = vmatprep.mubr.bf16.mxu0 0
    %229 = vmatmul.mubr.bf16.gmra.mrb[0].mxu0 %v87
    %v230 = vpop.f32.mrb[0].mxu0
    %v231 = vadd.f32 %v109, %v230
    %v232 = vpop.f32.mrb[0].mxu0
    %v233 = vadd.f32 %v113, %v232
    %v234 = vpop.f32.mrb[0].mxu0
    %v235 = vadd.f32 %v109, %v234
    %v236 = vpop.f32.mrb[0].mxu0
    %v237 = vadd.f32 %v113, %v236
    %238 = vdwg.mxu0
    %v239 = vmul.f32 %v231, %v83
    %v240 = vmul.f32 %v235, %v84
    %v241 = vadd.f32 %v239, %v233
    %v242 = vadd.f32 %v240, %v237
    %243 = vst [vmem:[#allocation8] sm:$0xff] %v241
    %244 = vst [vmem:[#allocation8 + $0x8] sm:$0xff] %v242
    // Predicated region
    $region30: #{tpu_custom_call.1} parent=1 // pred_check
      _
    $region31: #{tpu_custom_call.1} parent=1 // pred_check_branch
      %246 = sbr.rel (0) target = $region33
    $region32: #{tpu_custom_call.1} parent=1 // pred_region
      %s248 = ssub.s32 256, 256
      %249 = vsyncadd [#allocation4], %s248
      %s250 = sshll.u32 [#allocation8], 4
      %s251 = int_to_ptr.vmem [resolvable:$true] %s250
      %256 = dma.vmem_to_hbm [thread:$0]  %s251, 256, %s4, [#allocation4], 128, 128, 8
    $region33: #{tpu_custom_call.1} parent=1 // pred_fallthru
      _
    // Predicated region
    $region34: #{tpu_custom_call.1} parent=1 // pred_check
      _
    $region35: #{tpu_custom_call.1} parent=1 // pred_check_branch
      %258 = sbr.rel (0) target = $region37
    $region36: #{tpu_custom_call.1} parent=1 // pred_region
      %259 = dma.done [#allocation4], 256
    $region37: #{tpu_custom_call.1} parent=1 // pred_fallthru
      _
    %260 = vsyncpa [#allocation3], 1
    %261 = vsyncpa [#allocation6], 1
    %262 = vsyncpa [#allocation4], 1

</llo_original>
